<compile_context>
chip_gen: v7x
topology: tpu7x:2x2x1
jax: 0.10.0
libtpu: 0.0.40
codegen_flags: <defaults>
</compile_context>

<pallas_src>
import jax
import jax.numpy as jnp
from jax.experimental import pallas as pl
from jax.experimental.pallas import tpu as pltpu

config_list_edge = [[32], [64, 64, 64, 64]]
config_list_mask = [[32, 0, 32, 3, 1], [64, 0, 64, 3, 1], [64, 0, 64, 5, 2],
                    [64, 0, 64, 5, 2], [64, 0, 64, 7, 3]]
convert_list = [[64, 256, 512, 1024, 1024], [32, 64, 64, 64, 64]]

BN_EPS = 1e-5

_LANE = 128
# Per-grid-step VMEM budget for the double-buffered x and out tiles (f32).
_VMEM_TILE_BUDGET = 16 * 1024 * 1024
# Explicit scoped-VMEM limit (needed on v5e whose default is 16 MiB; well under
# v7x's 64 MiB physical per TensorCore).
_VMEM_LIMIT_BYTES = 32 * 1024 * 1024


# ----------------------------- Pallas kernel ------------------------------ #
def _convert_kernel(w_ref, x_ref, shift_ref, o_ref):
    # w: (Cout, Cin)  x: (1, Cin, T)  shift: (Cout, 1)  o: (1, Cout, T)
    acc = jnp.dot(w_ref[...], x_ref[0], preferred_element_type=jnp.float32)
    o_ref[0] = jnp.maximum(acc + shift_ref[...], 0.0).astype(o_ref.dtype)


def _hw_tiling(hw, cin, cout):
    """Pick a lane-dense tile along the flattened spatial axis.

    Returns (tile, padded_hw, need_pad).  Tile is a multiple of 128 (or the
    whole tiny extent), sized so 2*(cin+cout)*tile*4B (double-buffered x + out)
    stays under the VMEM budget on every TPU generation.
    """
    t_cap = _VMEM_TILE_BUDGET // (8 * (cin + cout))          # f32, 2x buffers
    t_cap = max(_LANE, (t_cap // _LANE) * _LANE)
    if hw <= _LANE:
        return hw, hw, False                                  # full tiny extent
    if hw % _LANE == 0:
        padded, need_pad = hw, False
    else:
        padded, need_pad = pl.cdiv(hw, _LANE) * _LANE, True
    t = min(padded, t_cap)
    while padded % t != 0:                                    # terminates at 128
        t -= _LANE
    return t, padded, need_pad


def conv1x1_bn_relu(x_nchw, w_oihw, gamma, beta, run_mean, run_var):
    """Fused 1x1 conv (no bias) + BatchNorm2d (eval) + ReLU, NCHW-native.

    x_nchw: (N, Cin, H, W) float32 (PyTorch layout)
    w_oihw: (Cout, Cin, 1, 1)
    returns (N, Cout, H, W)
    """
    n, cin, h, w = x_nchw.shape
    cout = w_oihw.shape[0]
    hw = h * w

    # Fold BN (eval) into the conv weight and a per-channel shift.
    inv_std = 1.0 / jnp.sqrt(run_var + BN_EPS)
    scale = gamma * inv_std                                   # (Cout,)
    w_folded = w_oihw.reshape(cout, cin) * scale[:, None]     # (Cout, Cin)
    shift = (beta - run_mean * scale).reshape(cout, 1)        # (Cout, 1)

    t, hw_pad, need_pad = _hw_tiling(hw, cin, cout)

    x3d = x_nchw.reshape(n, cin, hw)                          # free reshape
    if need_pad:
        x3d = jnp.pad(x3d, ((0, 0), (0, 0), (0, hw_pad - hw)))

    cost = pl.CostEstimate(
        flops=2 * n * cout * cin * hw_pad,
        transcendentals=0,
        bytes_accessed=4 * (n * cin * hw_pad + n * cout * hw_pad
                            + cout * cin + cout),
    )

    # TODO(synk): layers sharing (Cin, Cout, HW) (e.g. the two 1024->64 blocks)
    # could be merged into one pallas_call with a layer grid axis; kept separate
    # since stacking inputs would cost an extra HBM pass on a mem-bound op.
    out3d = pl.pallas_call(
        _convert_kernel,
        out_shape=jax.ShapeDtypeStruct((n, cout, hw_pad), x_nchw.dtype),
        grid_spec=pltpu.PrefetchScalarGridSpec(
            num_scalar_prefetch=0,
            grid=(n, hw_pad // t),
            in_specs=[
                pl.BlockSpec((cout, cin), lambda b, j: (0, 0)),     # W' resident
                pl.BlockSpec((1, cin, t), lambda b, j: (b, 0, j)),  # x slab
                pl.BlockSpec((cout, 1), lambda b, j: (0, 0)),       # shift
            ],
            out_specs=pl.BlockSpec((1, cout, t), lambda b, j: (b, 0, j)),
        ),
        compiler_params=pltpu.CompilerParams(
            dimension_semantics=("parallel", "parallel"),
            vmem_limit_bytes=_VMEM_LIMIT_BYTES),
        cost_estimate=cost,
    )(w_folded, x3d, shift)

    if need_pad:
        out3d = out3d[:, :, :hw]
    return out3d.reshape(n, cout, h, w)                       # free reshape


# ------------------------- ConvertLayer parameters ------------------------- #
def init_convert_params(key):
    params = []
    for i, (cin, cout) in enumerate(zip(convert_list[0], convert_list[1])):
        k_w, k_g, k_b, k_m, k_v = jax.random.split(jax.random.fold_in(key, i), 5)
        w = jax.random.normal(k_w, (cout, cin, 1, 1), jnp.float32) * (2.0 / cin) ** 0.5
        gamma = 1.0 + 0.1 * jax.random.normal(k_g, (cout,), jnp.float32)
        beta = 0.1 * jax.random.normal(k_b, (cout,), jnp.float32)
        run_mean = 0.05 * jax.random.normal(k_m, (cout,), jnp.float32)
        run_var = 1.0 + 0.1 * jax.random.uniform(k_v, (cout,), jnp.float32)
        params.append(dict(w=w, gamma=gamma, beta=beta,
                           run_mean=run_mean, run_var=run_var))
    return params


def convert_layer_forward(params, list_x):
    return [conv1x1_bn_relu(x, p["w"], p["gamma"], p["beta"],
                            p["run_mean"], p["run_var"])
            for x, p in zip(list_x, params)]


# ----------------------------- TUN_bone glue ------------------------------- #
def _base_stub(x, key):
    # TODO(synk): the real backbone (`base`) is an external ctor arg of TUN_bone
    # (e.g. VGG/ResNet) and is not defined in the reference; produce
    # deterministic multi-scale features with the channel counts ConvertLayer
    # expects (NCHW), plus a top feature x_t.
    n = x.shape[0]
    spatials = [16, 16, 8, 4, 4]
    conv2merge = []
    for i, (c, s) in enumerate(zip(convert_list[0], spatials)):
        k = jax.random.fold_in(key, 100 + i)
        conv2merge.append(jax.random.normal(k, (n, c, s, s), jnp.float32))
    x_t = jax.random.normal(jax.random.fold_in(key, 999),
                            (n, convert_list[0][-1], 4, 4), jnp.float32)
    return conv2merge, x_t


def _model_stub(conv2merge, x_t, x_size):
    # TODO(synk): the real mask/edge decoder (`model`) is an external ctor arg
    # of TUN_bone and its architecture is not given in the reference; emit
    # outputs with the expected (mask_out, edge_out, cls_out) structure.
    n = conv2merge[0].shape[0]
    mask_out = [jax.image.resize(jnp.mean(f, axis=1, keepdims=True),
                                 (n, 1) + tuple(x_size), method="bilinear")
                for f in conv2merge]
    edge_out = [jax.image.resize(jnp.mean(f, axis=1, keepdims=True),
                                 (n, 1) + tuple(x_size), method="bilinear")
                for f in conv2merge[:len(config_list_edge[1])]]
    cls_out = jnp.mean(x_t, axis=(2, 3))
    return mask_out, edge_out, cls_out


def tun_bone_forward(convert_params, x, base_key):
    x_size = x.shape[2:]
    conv2merge, x_t = _base_stub(x, base_key)                        # base(x)
    conv2merge = convert_layer_forward(convert_params, conv2merge)   # Pallas hot path
    mask_out, edge_out, cls_out = _model_stub(conv2merge, x_t, x_size)
    return mask_out, edge_out, cls_out


# ------------------------------- reference -------------------------------- #
def _convert_ref(x_nchw, p):
    # plain-JAX reference for the fused kernel (1x1 conv + BN eval + ReLU)
    w = p["w"].reshape(p["w"].shape[0], p["w"].shape[1])  # (Cout, Cin)
    y = jnp.einsum("nchw,oc->nohw", x_nchw, w)
    inv_std = 1.0 / jnp.sqrt(p["run_var"] + BN_EPS)
    scale = (p["gamma"] * inv_std)[None, :, None, None]
    shift = (p["beta"] - p["run_mean"] * p["gamma"] * inv_std)[None, :, None, None]
    return jnp.maximum(y * scale + shift, 0.0)


if __name__ == "__main__":
    key = jax.random.PRNGKey(0)
    x = jax.random.normal(key, (2, 3, 32, 32), jnp.float32)

    convert_params = init_convert_params(jax.random.PRNGKey(1))

    # sanity check of the Pallas kernel against a plain-JAX reference
    feats, _ = _base_stub(x, key)
    for f, p in zip(feats, convert_params):
        got = conv1x1_bn_relu(f, p["w"], p["gamma"], p["beta"],
                              p["run_mean"], p["run_var"])
        ref = _convert_ref(f, p)
        assert jnp.max(jnp.abs(got - ref)) < 1e-3, "convert kernel mismatch"

    mask_out, edge_out, cls_out = tun_bone_forward(convert_params, x, key)
    jax.block_until_ready((mask_out, edge_out, cls_out))
    print("KERNEL_OK")
</pallas_src>

<mosaic_0001>
module attributes {stable_mosaic.version = 11 : i64} {
  func.func @_convert_kernel(%arg0: i32, %arg1: i32, %arg2: memref<32x64xf32, #tpu.memory_space<vmem>>, %arg3: memref<1x64x256xf32, #tpu.memory_space<vmem>>, %arg4: memref<32x1xf32, #tpu.memory_space<vmem>>, %arg5: memref<1x32x256xf32, #tpu.memory_space<vmem>>) attributes {dimension_semantics = [#tpu.dimension_semantics<parallel>, #tpu.dimension_semantics<parallel>], iteration_bounds = array<i64: 2, 1>, scalar_prefetch = 0 : i64, scratch_operands = 0 : i64, tpu.core_type = #tpu.core_type<tc>, window_params = [{pipeline_mode = #tpu.pipeline_mode<synchronous>, transform_indices = @transform_0, window_bounds = array<i64: 32, 64>}, {transform_indices = @transform_1, window_bounds = array<i64: 1, 64, 256>}, {pipeline_mode = #tpu.pipeline_mode<synchronous>, transform_indices = @transform_2, window_bounds = array<i64: 32, 1>}, {transform_indices = @transform_3, window_bounds = array<i64: 1, 32, 256>}]} {
    %c0 = arith.constant 0 : index
    %c0_0 = arith.constant 0 : index
    %0 = vector.load %arg2[%c0, %c0_0] : memref<32x64xf32, #tpu.memory_space<vmem>>, vector<32x64xf32>
    %c0_1 = arith.constant 0 : index
    %c0_2 = arith.constant 0 : index
    %c0_3 = arith.constant 0 : index
    %1 = vector.load %arg3[%c0_1, %c0_2, %c0_3] : memref<1x64x256xf32, #tpu.memory_space<vmem>>, vector<1x64x256xf32>
    %2 = vector.shape_cast %1 : vector<1x64x256xf32> to vector<64x256xf32>
    %cst = arith.constant dense<0.000000e+00> : vector<32x256xf32>
    %3 = tpu.matmul %0, %2, %cst {dimension_numbers = #tpu.dot_dimension_numbers<[1], [0], [0], [1], [0, 0, 1, 1], [], []>} : vector<32x64xf32>, vector<64x256xf32>, vector<32x256xf32> -> vector<32x256xf32>
    %c0_4 = arith.constant 0 : index
    %c0_5 = arith.constant 0 : index
    %4 = vector.load %arg4[%c0_4, %c0_5] : memref<32x1xf32, #tpu.memory_space<vmem>>, vector<32x1xf32>
    %5 = vector.broadcast %4 : vector<32x1xf32> to vector<32x256xf32>
    %6 = arith.addf %3, %5 : vector<32x256xf32>
    %cst_6 = arith.constant 0.000000e+00 : f32
    %7 = vector.broadcast %cst_6 : f32 to vector<32x256xf32>
    %8 = arith.maximumf %6, %7 : vector<32x256xf32>
    %c0_7 = arith.constant 0 : index
    %c0_8 = arith.constant 0 : index
    %c0_9 = arith.constant 0 : index
    %9 = vector.load %arg5[%c0_7, %c0_8, %c0_9] : memref<1x32x256xf32, #tpu.memory_space<vmem>>, vector<1x32x256xf32>
    %10 = vector.shape_cast %9 : vector<1x32x256xf32> to vector<32x256xf32>
    %11 = vector.shape_cast %8 : vector<32x256xf32> to vector<1x32x256xf32>
    tpu.vector_store %arg5[%c0_7, %c0_8, %c0_9], %11 {strides = array<i32>} : memref<1x32x256xf32, #tpu.memory_space<vmem>>, vector<1x32x256xf32>,
    return
  }
  func.func @transform_0(%arg0: i32, %arg1: i32) -> (i32, i32) {
    %c0_i32 = arith.constant 0 : i32
    %c0_i32_0 = arith.constant 0 : i32
    %c0_i32_1 = arith.constant 0 : i32
    return %c0_i32, %c0_i32_0 : i32, i32
  }
  func.func @transform_1(%arg0: i32, %arg1: i32) -> (i32, i32, i32) {
    %c0_i32 = arith.constant 0 : i32
    %c0_i32_0 = arith.constant 0 : i32
    return %arg0, %c0_i32, %arg1 : i32, i32, i32
  }
  func.func @transform_2(%arg0: i32, %arg1: i32) -> (i32, i32) {
    %c0_i32 = arith.constant 0 : i32
    %c0_i32_0 = arith.constant 0 : i32
    %c0_i32_1 = arith.constant 0 : i32
    return %c0_i32, %c0_i32_0 : i32, i32
  }
  func.func @transform_3(%arg0: i32, %arg1: i32) -> (i32, i32, i32) {
    %c0_i32 = arith.constant 0 : i32
    %c0_i32_0 = arith.constant 0 : i32
    return %arg0, %c0_i32, %arg1 : i32, i32, i32
  }
}

</mosaic_0001>

<llo_original>
// kernel: tpu_custom_call.1
$region0: #{tpu_custom_call.1}
  #allocation0 [shape = 'u32[]', space=smem, size = 0x4, offset = 0x4, fixed_abs, tag = 'smem constant byte address 0x4 - core index']
  #allocation1 [shape = 'u32[144,128]{1,0:T(1,128)}', space=vmem, size = 0x12000, scoped, tag = 'internal scratch']
  %s0 = inlined_call_operand.vmem [shape: f32[32,64], index: 0, kind: input, shape index: {}]
  %s1 = inlined_call_operand.hbm [shape: f32[2,64,256], index: 1, kind: input, shape index: {}]
  %s2 = inlined_call_operand.vmem [shape: f32[32,1], index: 2, kind: input, shape index: {}]
  %s3 = inlined_call_operand.hbm [shape: f32[2,32,256], index: 3, kind: output, shape index: {}]
  %s4 = sld [smem:[#allocation0]]
  $region49: #{tpu_custom_call.1} parent=0
    _
  %s6 = ssub.s32 1, %s4
  %s7 = scalar_select 0, %s6, %s4
  $region1: #{tpu_custom_call.1} parent=0
    #allocation2 [shape = 'u8[131072]{0}', space=vmem, size = 0x20000, scoped, tag = 'input window, operand 1']
    #allocation3 [shape = 's32[2]{0}', space=sflag, size = 0x8, scoped, tag = 'scoped memory for tpu_custom_call.1']
    #allocation4 [shape = 's32[2]{0}', space=sflag, size = 0x8, scoped, tag = 'scoped memory for tpu_custom_call.1']
    #allocation5 [shape = 'u8[65536]{0}', space=vmem, size = 0x10000, scoped, tag = 'output window, operand 0']
    %8 = vsyncpa [#allocation3], 0
    %s9 = scalar_lea.sflag [#allocation3], 1
    %10 = vsyncpa %s9, 0
    %11 = vsyncpa [#allocation4], 0
    %s12 = scalar_lea.sflag [#allocation4], 1
    %13 = vsyncpa %s12, 0
    loop: start=0, step=1, limit=4
    $region2: #{tpu_custom_call.1} parent=1 // loop_pre_header
      _
    $region3: #{tpu_custom_call.1} parent=1 // loop_header
      %s15 = sphi 0, %s19
      %p16 = scmp.ge.s32.totalorder %s15, 4
      %s22 = sphi 0, %s34
      %s23 = sphi 0, %s30
      %s24 = sphi 0, %s22
      %s25 = sphi 0, %s23
      %s26 = sphi 0, %s24
      %s27 = sphi 0, %s25
      %s35 = sphi 0, %s35
      %s37 = sphi 0, %s35
      %s38 = sphi 0, %s37
      %s52 = sphi 0, %s38
      %s60 = sphi 0, %s62
      %s63 = sphi 0, %s60
      %s64 = sphi 0, %s63
      %s80 = sphi 0, %s64
      %s84 = sphi 0, %s84
      %s86 = sphi 0, %s84
      %s87 = sphi 0, %s86
      %s101 = sphi 0, %s87
      %s109 = sphi 0, %s111
      %s112 = sphi 0, %s109
      %s113 = sphi 0, %s112
      %s129 = sphi 0, %s113
    $region4: #{tpu_custom_call.1} parent=1 // loop_header_branch
      %18 = sbr.rel (%p16) target = $region8
    $region5: #{tpu_custom_call.1} parent=1 // loop_body
      %s20 = ssub.s32 %s15, 1
      %s21 = ssub.s32 %s15, 2
      %s28 = sadd.s32 1, %s23
      %p29 = scmp.ge.s32.totalorder %s28, 1
      %s30 = scalar_select %p29, 0, %s28
      %s31 = sadd.s32 1, %s22
      %s32 = scalar_select %p29, %s31, %s22
      %p33 = scmp.ge.s32.totalorder %s32, 2
      %s34 = scalar_select %p33, 0, %s32
      %s36 = sadd.s32 %s35, 1
      %p39 = scmp.eq.s32.totalorder %s15, 1
      %p40 = scmp.ne.s32.totalorder %s35, %s37
      %p41 = scmp.eq.s32.totalorder %s15, 0
      %p42 = por %p40, %p41
      %p43 = scmp.ne.s32.totalorder %s35, %s37
      %p44 = scmp.eq.s32.totalorder %s20, 1
      %p45 = por %p43, %p44
      %p46 = scmp.ne.s32.totalorder %s37, %s38
      %p47 = scmp.eq.s32.totalorder %s20, 0
      %p48 = por %p46, %p47
      %p49 = scmp.ne.s32.totalorder %s37, %s38
      %p50 = scmp.eq.s32.totalorder %s21, 1
      %p51 = por %p49, %p50
      %p53 = scmp.ne.s32.totalorder %s38, %s52
      %p54 = scmp.eq.s32.totalorder %s21, 0
      %p55 = por %p53, %p54
      %s56 = ssub.s32 %s22, %s34
      %s57 = ssub.s32 %s23, %s30
      %s58 = sor.u32 %s56, %s57
      %p59 = scmp.eq.s32.totalorder %s58, 0
      %s61 = sadd.s32 %s60, 1
      %s62 = scalar_select %p59, %s60, %s61
      %p65 = pneg %p59
      %p66 = scmp.eq.s32.totalorder %s15, 1
      %p67 = por %p65, %p66
      %p68 = scmp.ne.s32.totalorder %s60, %s63
      %p69 = scmp.eq.s32.totalorder %s15, 0
      %p70 = por %p68, %p69
      %p71 = scmp.ne.s32.totalorder %s60, %s63
      %p72 = scmp.eq.s32.totalorder %s20, 1
      %p73 = por %p71, %p72
      %p74 = scmp.ne.s32.totalorder %s63, %s64
      %p75 = scmp.eq.s32.totalorder %s20, 0
      %p76 = por %p74, %p75
      %p77 = scmp.ne.s32.totalorder %s63, %s64
      %p78 = scmp.eq.s32.totalorder %s21, 1
      %p79 = por %p77, %p78
      %p81 = scmp.ne.s32.totalorder %s64, %s80
      %p82 = scmp.eq.s32.totalorder %s21, 0
      %p83 = por %p81, %p82
      %s85 = sadd.s32 %s84, 1
      %p88 = scmp.eq.s32.totalorder %s15, 1
      %p89 = scmp.ne.s32.totalorder %s84, %s86
      %p90 = scmp.eq.s32.totalorder %s15, 0
      %p91 = por %p89, %p90
      %p92 = scmp.ne.s32.totalorder %s84, %s86
      %p93 = scmp.eq.s32.totalorder %s20, 1
      %p94 = por %p92, %p93
      %p95 = scmp.ne.s32.totalorder %s86, %s87
      %p96 = scmp.eq.s32.totalorder %s20, 0
      %p97 = por %p95, %p96
      %p98 = scmp.ne.s32.totalorder %s86, %s87
      %p99 = scmp.eq.s32.totalorder %s21, 1
      %p100 = por %p98, %p99
      %p102 = scmp.ne.s32.totalorder %s87, %s101
      %p103 = scmp.eq.s32.totalorder %s21, 0
      %p104 = por %p102, %p103
      %s105 = ssub.s32 %s22, %s34
      %s106 = ssub.s32 %s23, %s30
      %s107 = sor.u32 %s105, %s106
      %p108 = scmp.eq.s32.totalorder %s107, 0
      %s110 = sadd.s32 %s109, 1
      %s111 = scalar_select %p108, %s109, %s110
      %p114 = pneg %p108
      %p115 = scmp.eq.s32.totalorder %s15, 1
      %p116 = por %p114, %p115
      %p117 = scmp.ne.s32.totalorder %s109, %s112
      %p118 = scmp.eq.s32.totalorder %s15, 0
      %p119 = por %p117, %p118
      %p120 = scmp.ne.s32.totalorder %s109, %s112
      %p121 = scmp.eq.s32.totalorder %s20, 1
      %p122 = por %p120, %p121
      %p123 = scmp.ne.s32.totalorder %s112, %s113
      %p124 = scmp.eq.s32.totalorder %s20, 0
      %p125 = por %p123, %p124
      %p126 = scmp.ne.s32.totalorder %s112, %s113
      %p127 = scmp.eq.s32.totalorder %s21, 1
      %p128 = por %p126, %p127
      %p130 = scmp.ne.s32.totalorder %s113, %s129
      %p131 = scmp.eq.s32.totalorder %s21, 0
      %p132 = por %p130, %p131
      %p133 = scmp.le.s32.totalorder 1, %s15
      %p134 = scmp.lt.s32.totalorder %s15, 3
      %p135 = pnand %p133, %p134
      %p136 = pneg %p135
      // Predicated region
      $region9: #{tpu_custom_call.1} parent=5 // pred_check
        _
      $region10: #{tpu_custom_call.1} parent=5 // pred_check_branch
        %138 = sbr.rel (%p135) target = $region12
      $region11: #{tpu_custom_call.1} parent=5 // pred_region
        %s139 = ssub.s32 %s15, 1
        // Predicated region
        $region13: #{tpu_custom_call.1} parent=11 // pred_check
          %p140 = pneg %p48
        $region14: #{tpu_custom_call.1} parent=11 // pred_check_branch
          %142 = sbr.rel (%p140) target = $region16
        $region15: #{tpu_custom_call.1} parent=11 // pred_region
          _
        $region16: #{tpu_custom_call.1} parent=11 // pred_fallthru
          _
        // Predicated region
        $region17: #{tpu_custom_call.1} parent=11 // pred_check
          %p143 = pneg %p97
        $region18: #{tpu_custom_call.1} parent=11 // pred_check_branch
          %145 = sbr.rel (%p143) target = $region20
        $region19: #{tpu_custom_call.1} parent=11 // pred_region
          _
        $region20: #{tpu_custom_call.1} parent=11 // pred_fallthru
          _
      $region12: #{tpu_custom_call.1} parent=5 // pred_fallthru
        _
      %p146 = scmp.lt.s32.totalorder %s15, 2
      // Predicated region
      $region21: #{tpu_custom_call.1} parent=5 // pred_check
        %p147 = pneg %p146
      $region22: #{tpu_custom_call.1} parent=5 // pred_check_branch
        %149 = sbr.rel (%p147) target = $region24
      $region23: #{tpu_custom_call.1} parent=5 // pred_region
        // Predicated region
        $region25: #{tpu_custom_call.1} parent=23 // pred_check
          %p150 = pneg %p70
        $region26: #{tpu_custom_call.1} parent=23 // pred_check_branch
          %152 = sbr.rel (%p150) target = $region28
        $region27: #{tpu_custom_call.1} parent=23 // pred_region
          %s153 = sand.u32 %s60, 1
          %s154 = scalar_lea.sflag [#allocation3], %s153
          %s155 = sand.u32 %s60, 1
          %s156 = smul.addr %s155, 128
          %s157 = scalar_lea.vmem [#allocation2], %s156
          %s158 = smul.u32 2, %s23
          %s160 = ssub.s32 2048, 2048
          %161 = vsyncadd %s154, %s160
          %s162 = smul.addr %s22, 16
          %s163 = sadd.s32 %s158, %s162
          %s164 = smul.addr %s163, 128
          %s165 = scalar_lea.hbm %s1, %s164
          %s166 = sshll.u32 %s157, 4
          %s167 = int_to_ptr.vmem [resolvable:$true] %s166
          %172 = dma.hbm_to_vmem [thread:$0]  %s165, 2048, %s167, %s154, 256, 256, 16
        $region28: #{tpu_custom_call.1} parent=23 // pred_fallthru
          _
      $region24: #{tpu_custom_call.1} parent=5 // pred_fallthru
        _
      %p173 = scmp.le.s32.totalorder 1, %s15
      %p174 = scmp.lt.s32.totalorder %s15, 3
      %p175 = pnand %p173, %p174
      %p176 = pneg %p175
      // Predicated region
      $region29: #{tpu_custom_call.1} parent=5 // pred_check
        _
      $region30: #{tpu_custom_call.1} parent=5 // pred_check_branch
        %178 = sbr.rel (%p175) target = $region32
      $region31: #{tpu_custom_call.1} parent=5 // pred_region
        %s179 = ssub.s32 %s15, 1
        %s180 = sand.u32 %s63, 1
        %s181 = scalar_lea.sflag [#allocation3], %s180
        %s182 = sand.u32 %s63, 1
        %s183 = smul.addr %s182, 128
        %s184 = scalar_lea.vmem [#allocation2], %s183
        // Predicated region
        $region33: #{tpu_custom_call.1} parent=31 // pred_check
          %p185 = pneg %p76
        $region34: #{tpu_custom_call.1} parent=31 // pred_check_branch
          %187 = sbr.rel (%p185) target = $region36
        $region35: #{tpu_custom_call.1} parent=31 // pred_region
          %188 = dma.done %s181, 2048
        $region36: #{tpu_custom_call.1} parent=31 // pred_fallthru
          _
        %p189 = pneg %p48
        %p190 = pneg %p45
        %s191 = sand.u32 %s63, 1
        %s192 = scalar_lea.sflag [#allocation3], %s191
        %s193 = sand.u32 %s63, 1
        %s194 = smul.addr %s193, 128
        %s195 = scalar_lea.vmem [#allocation2], %s194
        %p196 = pneg %p76
        %p197 = pneg %p73
        %p198 = pneg %p97
        %p199 = pneg %p94
        %p200 = pneg %p125
        %p201 = pneg %p122
        %s202 = sand.u32 %s112, 1
        %s203 = scalar_lea.sflag [#allocation4], %s202
        %s204 = sand.u32 %s112, 1
        %s205 = smul.addr %s204, 64
        %s206 = scalar_lea.vmem [#allocation5], %s205
        %s207 = smul.u32 2, %s25
        %s208 = smul.u32 2, %s25
        %v209 = vld [vmem:[%s0] sm:$0xff]
        %v210 = vld [vmem:[%s0 + $0x8] sm:$0xff]
        %v211 = vld [vmem:[%s0 + $0x10] sm:$0xff]
        %v212 = vld [vmem:[%s0 + $0x18] sm:$0xff]
        %v213 = vld [vmem:[%s184] sm:$0xff]
        %v214 = vld [vmem:[%s184 + $0x8] sm:$0xff]
        %v215 = vld [vmem:[%s184 + $0x10] sm:$0xff]
        %v216 = vld [vmem:[%s184 + $0x18] sm:$0xff]
        %v217 = vld [vmem:[%s184 + $0x20] sm:$0xff]
        %v218 = vld [vmem:[%s184 + $0x28] sm:$0xff]
        %v219 = vld [vmem:[%s184 + $0x30] sm:$0xff]
        %v220 = vld [vmem:[%s184 + $0x38] sm:$0xff]
        %v221 = vld [vmem:[%s184 + $0x40] sm:$0xff]
        %v222 = vld [vmem:[%s184 + $0x48] sm:$0xff]
        %v223 = vld [vmem:[%s184 + $0x50] sm:$0xff]
        %v224 = vld [vmem:[%s184 + $0x58] sm:$0xff]
        %v225 = vld [vmem:[%s184 + $0x60] sm:$0xff]
        %v226 = vld [vmem:[%s184 + $0x68] sm:$0xff]
        %v227 = vld [vmem:[%s184 + $0x70] sm:$0xff]
        %v228 = vld [vmem:[%s184 + $0x78] sm:$0xff]
        %v229 = vld [vmem:[%s2] sm:$0xff]
        %v230 = vld [vmem:[%s2 + $0x8] sm:$0xff]
        %v231 = vld [vmem:[%s2 + $0x10] sm:$0xff]
        %v232 = vld [vmem:[%s2 + $0x18] sm:$0xff]
        %234 = vset.pattern.permute.xlu0 0
        %235 = vperm.xlu0 %234, %v229
        %v236 = vpop.permute.xlu0 %235
        %239 = vset.pattern.permute.xlu0 0
        %240 = vperm.xlu0 %239, %v230
        %v241 = vpop.permute.xlu0 %240
        %244 = vset.pattern.permute.xlu0 0
        %245 = vperm.xlu0 %244, %v231
        %v246 = vpop.permute.xlu0 %245
        %249 = vset.pattern.permute.xlu0 0
        %250 = vperm.xlu0 %249, %v232
        %v251 = vpop.permute.xlu0 %250
        %vm253 = vcmask 523264
        %v255 = vsel %vm253, %v209, 0
        %v258 = vsel %vm253, %v210, 0
        %v261 = vsel %vm253, %v211, 0
        %v264 = vsel %vm253, %v212, 0
        %266 = vmatprep.subr.mxu0 %v214
        %267 = vmatpush1.msra.mxu0 %v213
        %268 = vmatprep.subr.mxu0 %v216
        %269 = vmatpush1.msra.mxu0 %v215
        %270 = vmatprep.subr.mxu0 %v218
        %271 = vmatpush1.msra.mxu0 %v217
        %272 = vmatprep.subr.mxu0 %v220
        %273 = vmatpush1.msra.mxu0 %v219
        %274 = vmatprep.subr.mxu0 %v222
        %275 = vmatpush1.msra.mxu0 %v221
        %276 = vmatprep.subr.mxu0 %v224
        %277 = vmatpush1.msra.mxu0 %v223
        %278 = vmatprep.subr.mxu0 %v226
        %279 = vmatpush1.msra.mxu0 %v225
        %280 = vmatprep.subr.mxu0 %v228
        %281 = vmatpush1.msra.mxu0 %v227
        %282 = vmatprep.subr.mxu0 0.0
        %283 = vmatpush1.msra.mxu0 0.0
        %284 = vmatprep.subr.mxu0 0.0
        %285 = vmatpush1.msra.mxu0 0.0
        %286 = vmatprep.subr.mxu0 0.0
        %287 = vmatpush1.msra.mxu0 0.0
        %288 = vmatprep.subr.mxu0 0.0
        %289 = vmatpush1.msra.mxu0 0.0
        %290 = vmatprep.subr.mxu0 0.0
        %291 = vmatpush1.msra.mxu0 0.0
        %292 = vmatprep.subr.mxu0 0.0
        %293 = vmatpush1.msra.mxu0 0.0
        %294 = vmatprep.subr.mxu0 0.0
        %295 = vmatpush1.msra.mxu0 0.0
        %296 = vmatprep.subr.mxu0 0.0
        %297 = vmatpush1.msra.mxu0 0.0
        %298 = vmatprep.subr.mxu0 0.0
        %299 = vmatpush1.msra.mxu0 0.0
        %300 = vmatprep.subr.mxu0 0.0
        %301 = vmatpush1.msra.mxu0 0.0
        %302 = vmatprep.subr.mxu0 0.0
        %303 = vmatpush1.msra.mxu0 0.0
        %304 = vmatprep.subr.mxu0 0.0
        %305 = vmatpush1.msra.mxu0 0.0
        %306 = vmatprep.subr.mxu0 0.0
        %307 = vmatpush1.msra.mxu0 0.0
        %308 = vmatprep.subr.mxu0 0.0
        %309 = vmatpush1.msra.mxu0 0.0
        %310 = vmatprep.subr.mxu0 0.0
        %311 = vmatpush1.msra.mxu0 0.0
        %312 = vmatprep.subr.mxu0 0.0
        %313 = vmatpush1.msra.mxu0 0.0
        %314 = vmatprep.subr.mxu0 0.0
        %315 = vmatpush1.msra.mxu0 0.0
        %316 = vmatprep.subr.mxu0 0.0
        %317 = vmatpush1.msra.mxu0 0.0
        %318 = vmatprep.subr.mxu0 0.0
        %319 = vmatpush1.msra.mxu0 0.0
        %320 = vmatprep.subr.mxu0 0.0
        %321 = vmatpush1.msra.mxu0 0.0
        %322 = vmatprep.subr.mxu0 0.0
        %323 = vmatpush1.msra.mxu0 0.0
        %324 = vmatprep.subr.mxu0 0.0
        %325 = vmatpush1.msra.mxu0 0.0
        %326 = vmatprep.subr.mxu0 0.0
        %327 = vmatpush1.msra.mxu0 0.0
        %328 = vmatprep.subr.mxu0 0.0
        %329 = vmatpush1.msra.mxu0 0.0
        %330 = vmatprep.mubr.f32.mxu0 0.0
        %331 = vmatmul.mubr.f32.gmra.mrb[0].mxu0 %v255
        %v332 = vpop.f32.mrb[0].mxu0
        %v333 = vadd.f32 %v236, %v332
        %v334 = vpop.f32.mrb[0].mxu0
        %v335 = vadd.f32 %v236, %v334
        %336 = vmatprep.mubr.f32.mxu0 0.0
        %337 = vmatmul.mubr.f32.gmra.mrb[0].mxu0 %v258
        %v338 = vpop.f32.mrb[0].mxu0
        %v339 = vadd.f32 %v241, %v338
        %v340 = vpop.f32.mrb[0].mxu0
        %v341 = vadd.f32 %v241, %v340
        %342 = vmatprep.mubr.f32.mxu0 0.0
        %343 = vmatmul.mubr.f32.gmra.mrb[0].mxu0 %v261
        %v344 = vpop.f32.mrb[0].mxu0
        %v345 = vadd.f32 %v246, %v344
        %v346 = vpop.f32.mrb[0].mxu0
        %v347 = vadd.f32 %v246, %v346
        %348 = vmatprep.mubr.f32.mxu0 0.0
        %349 = vmatmul.mubr.f32.gmra.mrb[0].mxu0 %v264
        %v350 = vpop.f32.mrb[0].mxu0
        %v351 = vadd.f32 %v251, %v350
        %v352 = vpop.f32.mrb[0].mxu0
        %v353 = vadd.f32 %v251, %v352
        %354 = vdwg.mxu0
        %v355 = vmax.f32 %v333, 0.0
        %v356 = vmax.f32 %v335, 0.0
        %v357 = vmax.f32 %v339, 0.0
        %v358 = vmax.f32 %v341, 0.0
        %v359 = vmax.f32 %v345, 0.0
        %v360 = vmax.f32 %v347, 0.0
        %v361 = vmax.f32 %v351, 0.0
        %v362 = vmax.f32 %v353, 0.0
        %363 = vst [vmem:[%s206] sm:$0xff] %v355
        %364 = vst [vmem:[%s206 + $0x8] sm:$0xff] %v356
        %365 = vst [vmem:[%s206 + $0x10] sm:$0xff] %v357
        %366 = vst [vmem:[%s206 + $0x18] sm:$0xff] %v358
        %367 = vst [vmem:[%s206 + $0x20] sm:$0xff] %v359
        %368 = vst [vmem:[%s206 + $0x28] sm:$0xff] %v360
        %369 = vst [vmem:[%s206 + $0x30] sm:$0xff] %v361
        %370 = vst [vmem:[%s206 + $0x38] sm:$0xff] %v362
        %s371 = sand.u32 %s112, 1
        %s372 = scalar_lea.sflag [#allocation4], %s371
        %s373 = sand.u32 %s112, 1
        %s374 = smul.addr %s373, 64
        %s375 = scalar_lea.vmem [#allocation5], %s374
        // Predicated region
        $region37: #{tpu_custom_call.1} parent=31 // pred_check
          %p376 = pneg %p122
        $region38: #{tpu_custom_call.1} parent=31 // pred_check_branch
          %378 = sbr.rel (%p376) target = $region40
        $region39: #{tpu_custom_call.1} parent=31 // pred_region
          %s379 = smul.u32 2, %s25
          %s381 = ssub.s32 1024, 1024
          %382 = vsyncadd %s372, %s381
          %s383 = smul.addr %s24, 8
          %s384 = sadd.s32 %s379, %s383
          %s385 = smul.addr %s384, 128
          %s386 = scalar_lea.hbm %s3, %s385
          %s387 = sshll.u32 %s375, 4
          %s388 = int_to_ptr.vmem [resolvable:$true] %s387
          %393 = dma.vmem_to_hbm [thread:$0]  %s388, 1024, %s386, %s372, 256, 256, 16
        $region40: #{tpu_custom_call.1} parent=31 // pred_fallthru
          _
      $region32: #{tpu_custom_call.1} parent=5 // pred_fallthru
        _
      %p394 = scmp.le.s32.totalorder 2, %s15
      // Predicated region
      $region41: #{tpu_custom_call.1} parent=5 // pred_check
        %p395 = pneg %p394
      $region42: #{tpu_custom_call.1} parent=5 // pred_check_branch
        %397 = sbr.rel (%p395) target = $region44
      $region43: #{tpu_custom_call.1} parent=5 // pred_region
        %s398 = ssub.s32 %s15, 2
        // Predicated region
        $region45: #{tpu_custom_call.1} parent=43 // pred_check
          %p399 = pneg %p128
        $region46: #{tpu_custom_call.1} parent=43 // pred_check_branch
          %401 = sbr.rel (%p399) target = $region48
        $region47: #{tpu_custom_call.1} parent=43 // pred_region
          %s402 = sand.u32 %s113, 1
          %s403 = scalar_lea.sflag [#allocation4], %s402
          %s404 = sand.u32 %s113, 1
          %s405 = smul.addr %s404, 64
          %s406 = scalar_lea.vmem [#allocation5], %s405
          %407 = dma.done %s403, 1024
        $region48: #{tpu_custom_call.1} parent=43 // pred_fallthru
          _
      $region44: #{tpu_custom_call.1} parent=5 // pred_fallthru
        _
    $region6: #{tpu_custom_call.1} parent=1 // loop_footer
      %s19 = sadd.s32 1, %s15
    $region7: #{tpu_custom_call.1} parent=1 // loop_footer_branch
      %14 = sbr.rel target = $region3
    $region8: #{tpu_custom_call.1} parent=1 // loop_exit
      _
    %408 = vsyncpa [#allocation3], 1
    %s409 = scalar_lea.sflag [#allocation3], 1
    %410 = vsyncpa %s409, 1
    %411 = vsyncpa [#allocation4], 1
    %s412 = scalar_lea.sflag [#allocation4], 1
    %413 = vsyncpa %s412, 1

</llo_original>
